<compile_context>
chip_gen: v6e
topology: v6e:2x2x1
jax: 0.10.0
libtpu: 0.0.40
codegen_flags: <defaults>
</compile_context>

<pallas_src>
import functools

import jax
import jax.numpy as jnp
from jax.experimental import pallas as pl
from jax.experimental.pallas import tpu as pltpu


# ----------------------------------------------------------------------------
# Per-generation VMEM budgeting
# ----------------------------------------------------------------------------
def _vmem_capacity_bytes():
    try:
        return int(pltpu.get_tpu_info().vmem_capacity_bytes)
    except Exception:
        return 64 << 20            # conservative fallback (v7x physical per TC)


_VMEM_CAP = _vmem_capacity_bytes()
_VMEM_BUDGET = min(_VMEM_CAP // 2, 48 << 20)                       # our working-set budget
_VMEM_LIMIT = max(32 << 20, min(_VMEM_CAP - (8 << 20), _VMEM_BUDGET + (16 << 20)))


def _next_pow2(x):
    x = int(x)
    return 1 if x <= 1 else 1 << (x - 1).bit_length()


def _pick_spatial_block(s, c, itemsize, target_bytes):
    """Lane-dense spatial tile of 128 * 2^k elements, ~target_bytes, VMEM-capped."""
    # Worst case ~6 live tile-sized buffers (in/out double-buffered + f32 temporaries).
    tile_cap = max(_VMEM_BUDGET // 6, c * 128 * itemsize)   # never below one 128-lane tile
    tgt = max(c * 128 * itemsize, min(int(target_bytes), tile_cap))
    groups = max(1, tgt // (c * itemsize * 128))
    groups = 1 << (int(groups).bit_length() - 1)             # floor to power of two
    groups = min(groups, _next_pow2(pl.cdiv(s, 128)))        # don't grossly overshoot S
    return 128 * groups


# ----------------------------------------------------------------------------
# Shared in-kernel helpers
# ----------------------------------------------------------------------------
def _lane_group_tree_sum(xv, width):
    """(C, width) -> (C, 128) per-lane-group sums; width = 128 * 2^k.  Pure VPU adds."""
    while width > 128:
        width //= 2
        xv = xv[:, :width] + xv[:, width:]
    return xv


def _se_gate_from_mean(mean, w1_ref, b1_ref, w2_ref, b2_ref):
    """conv1(1x1x1) + ReLU + conv2(1x1x1) + sigmoid on the (C, 1) pooled mean."""
    h = jnp.dot(w1_ref[...], mean, preferred_element_type=jnp.float32) + b1_ref[...]
    h = jnp.maximum(h, 0.0)
    z = jnp.dot(w2_ref[...], h, preferred_element_type=jnp.float32) + b2_ref[...]
    return 1.0 / (1.0 + jnp.exp(-z))                        # (C, 1) f32


# ----------------------------------------------------------------------------
# Path A: fused tiled kernel, grid (N, phase, S/bs).  2 reads + 1 write of x.
# ----------------------------------------------------------------------------
def _se_fused_kernel(x_ref, w1_ref, b1_ref, w2_ref, b2_ref, o_ref,
                     acc_ref, gate_ref, *, true_s, bs, need_mask):
    p = pl.program_id(1)
    j = pl.program_id(2)

    @pl.when(p == 0)                     # ---- phase 0: pooled-sum reduction ----
    def _():
        @pl.when(j == 0)
        def _():
            acc_ref[...] = jnp.zeros_like(acc_ref)

        xv = x_ref[0].astype(jnp.float32)                               # (C, bs)
        if need_mask:                                                   # ragged spatial tail
            lane = jax.lax.broadcasted_iota(jnp.int32, xv.shape, 1) + j * bs
            xv = jnp.where(lane < true_s, xv, 0.0)
        acc_ref[...] += _lane_group_tree_sum(xv, bs)                    # (C, 128), VPU only

        @pl.when(j == pl.num_programs(2) - 1)                           # finalize once/batch
        def _():
            mean = jnp.sum(acc_ref[...], axis=-1, keepdims=True) * (1.0 / true_s)
            gate_ref[...] = _se_gate_from_mean(mean, w1_ref, b1_ref, w2_ref, b2_ref)

    @pl.when(p == 1)                     # ---- phase 1: y = x * gate ----
    def _():
        xv = x_ref[0].astype(jnp.float32)
        o_ref[0] = (xv * gate_ref[...]).astype(o_ref.dtype)


def _call_fused_tiled(x3, w1, b1, w2, b2, *, bs):
    n, c, s = x3.shape
    c16 = w1.shape[0]
    itemsize = x3.dtype.itemsize
    nj = pl.cdiv(s, bs)
    cost = pl.CostEstimate(
        flops=int(3 * n * c * s + 4 * n * c * c16),
        transcendentals=int(n * c),
        bytes_accessed=int(3 * n * c * s * itemsize + (2 * c * c16 + c + c16) * 4),
    )
    kernel = functools.partial(_se_fused_kernel, true_s=s, bs=bs,
                               need_mask=(s % bs != 0))
    return pl.pallas_call(
        kernel,
        out_shape=jax.ShapeDtypeStruct((n, c, s), x3.dtype),
        grid_spec=pltpu.PrefetchScalarGridSpec(
            num_scalar_prefetch=0,
            grid=(n, 2, nj),
            in_specs=[
                pl.BlockSpec((1, c, bs), lambda i, p, j: (i, 0, j)),
                pl.BlockSpec((c16, c), lambda i, p, j: (0, 0)),
                pl.BlockSpec((c16, 1), lambda i, p, j: (0, 0)),
                pl.BlockSpec((c, c16), lambda i, p, j: (0, 0)),
                pl.BlockSpec((c, 1), lambda i, p, j: (0, 0)),
            ],
            # Phase 0 pins the output index on this batch's first block, so nothing is
            # flushed to HBM until phase 1 has actually written it; phase 1 then streams
            # lane-dense blocks (j * p == 0 for p == 0, == j for p == 1).
            out_specs=pl.BlockSpec((1, c, bs), lambda i, p, j: (i, 0, j * p)),
            scratch_shapes=[
                pltpu.VMEM((c, 128), jnp.float32),   # pooled-sum accumulator (VPU adds)
                pltpu.VMEM((c, 1), jnp.float32),     # per-batch sigmoid gate
            ],
        ),
        compiler_params=pltpu.CompilerParams(
            dimension_semantics=("parallel", "arbitrary", "arbitrary"),
            vmem_limit_bytes=_VMEM_LIMIT),
        cost_estimate=cost,
    )(x3, w1, b1, w2, b2)


# ----------------------------------------------------------------------------
# Path B: VMEM-resident single-pass kernel, grid (N,).  1 read + 1 write of x.
# ----------------------------------------------------------------------------
def _se_resident_kernel(x_ref, w1_ref, b1_ref, w2_ref, b2_ref, o_ref, *, true_s):
    xv = x_ref[0].astype(jnp.float32)                                   # (C, S) resident
    mean = jnp.sum(xv, axis=-1, keepdims=True) * (1.0 / true_s)
    gate = _se_gate_from_mean(mean, w1_ref, b1_ref, w2_ref, b2_ref)
    o_ref[0] = (xv * gate).astype(o_ref.dtype)


def _call_resident(x3, w1, b1, w2, b2):
    n, c, s = x3.shape
    c16 = w1.shape[0]
    itemsize = x3.dtype.itemsize
    cost = pl.CostEstimate(
        flops=int(3 * n * c * s + 4 * n * c * c16),
        transcendentals=int(n * c),
        bytes_accessed=int(2 * n * c * s * itemsize + (2 * c * c16 + c + c16) * 4),
    )
    return pl.pallas_call(
        functools.partial(_se_resident_kernel, true_s=s),
        out_shape=jax.ShapeDtypeStruct((n, c, s), x3.dtype),
        grid_spec=pltpu.PrefetchScalarGridSpec(
            num_scalar_prefetch=0,
            grid=(n,),
            in_specs=[
                pl.BlockSpec((1, c, s), lambda i: (i, 0, 0)),   # full-extent S: no 128 rule
                pl.BlockSpec((c16, c), lambda i: (0, 0)),
                pl.BlockSpec((c16, 1), lambda i: (0, 0)),
                pl.BlockSpec((c, c16), lambda i: (0, 0)),
                pl.BlockSpec((c, 1), lambda i: (0, 0)),
            ],
            out_specs=pl.BlockSpec((1, c, s), lambda i: (i, 0, 0)),
        ),
        compiler_params=pltpu.CompilerParams(
            dimension_semantics=("parallel",),
            vmem_limit_bytes=_VMEM_LIMIT),
        cost_estimate=cost,
    )(x3, w1, b1, w2, b2)


# ----------------------------------------------------------------------------
# Forward pass (mirrors Selayer.forward)
# ----------------------------------------------------------------------------
@functools.partial(jax.jit, static_argnames=("force_tiled", "block_bytes"))
def selayer_forward(params, x, *, force_tiled=False, block_bytes=4 << 20):
    """x: (N, C, D, H, W) NCDHW (any float dtype); returns same shape and dtype."""
    n, c, d, h, w = x.shape
    s = d * h * w
    x3 = x.reshape(n, c, s)                 # free reshape; native dtype, no pad, no slice
    itemsize = x3.dtype.itemsize
    # Resident single-pass path when one (C, S) slab (double-buffered in/out plus f32
    # temporaries) comfortably fits the per-generation VMEM budget.
    resident_need = 6 * c * s * max(int(itemsize), 4)
    if (not force_tiled) and resident_need <= _VMEM_BUDGET:
        y3 = _call_resident(x3, params["w1"], params["b1"], params["w2"], params["b2"])
    else:
        bs = _pick_spatial_block(s, c, int(itemsize), block_bytes)
        y3 = _call_fused_tiled(x3, params["w1"], params["b1"], params["w2"], params["b2"],
                               bs=bs)
    return y3.reshape(n, c, d, h, w)


# ----------------------------------------------------------------------------
# Parameters (Conv3d k=1 weights stored as (out, in) matrices) and reference
# ----------------------------------------------------------------------------
def init_selayer_params(key, inplanes):
    c16 = inplanes // 16
    k1, k2, k3, k4 = jax.random.split(key, 4)
    bound1 = 1.0 / (inplanes ** 0.5)        # conv1 fan_in = inplanes
    bound2 = 1.0 / (c16 ** 0.5)             # conv2 fan_in = inplanes // 16
    return {
        "w1": jax.random.uniform(k1, (c16, inplanes), jnp.float32, -bound1, bound1),
        "b1": jax.random.uniform(k2, (c16, 1), jnp.float32, -bound1, bound1),
        "w2": jax.random.uniform(k3, (inplanes, c16), jnp.float32, -bound2, bound2),
        "b2": jax.random.uniform(k4, (inplanes, 1), jnp.float32, -bound2, bound2),
    }


def selayer_ref(params, x):
    """Pure-JAX reference of the PyTorch forward (correctness check)."""
    xf = x.astype(jnp.float32)
    m = jnp.mean(xf, axis=(2, 3, 4))                                  # (N, C)
    h = jnp.maximum(m @ params["w1"].T + params["b1"][:, 0], 0.0)     # (N, C//16)
    g = jax.nn.sigmoid(h @ params["w2"].T + params["b2"][:, 0])       # (N, C)
    return (xf * g[:, :, None, None, None]).astype(x.dtype)


if __name__ == "__main__":
    key = jax.random.PRNGKey(0)
    pkey, xkey, xkey2 = jax.random.split(key, 3)
    inplanes = 32                                    # // 16 -> squeeze dim 2
    params = init_selayer_params(pkey, inplanes)

    # 1) Small slab -> VMEM-resident single-pass path.  (N, C, D, H, W) NCDHW.
    x = jax.random.normal(xkey, (2, inplanes, 8, 8, 8), jnp.float32)
    y = selayer_forward(params, x)
    jax.block_until_ready(y)
    assert y.shape == x.shape and y.dtype == x.dtype
    y_ref = selayer_ref(params, x)
    assert jnp.allclose(y, y_ref, atol=1e-5, rtol=1e-5), \
        f"resident path max abs err {float(jnp.max(jnp.abs(y - y_ref)))}"

    # 2) Ragged spatial extent (D*H*W = 315, not a multiple of 128) on the fused tiled
    #    path with a small forced block -> exercises masking, accumulation and both phases.
    x2 = jax.random.normal(xkey2, (2, inplanes, 5, 9, 7), jnp.float32)
    y2 = selayer_forward(params, x2, force_tiled=True,
                         block_bytes=inplanes * 128 * 4)
    jax.block_until_ready(y2)
    y2_ref = selayer_ref(params, x2)
    assert jnp.allclose(y2, y2_ref, atol=1e-5, rtol=1e-5), \
        f"tiled path max abs err {float(jnp.max(jnp.abs(y2 - y2_ref)))}"

    print("KERNEL_OK")
</pallas_src>

<mosaic_0001>
module attributes {stable_mosaic.version = 11 : i64} {
  func.func @_se_resident_kernel(%arg0: i32, %arg1: memref<1x32x512xf32, #tpu.memory_space<vmem>>, %arg2: memref<2x32xf32, #tpu.memory_space<vmem>>, %arg3: memref<2x1xf32, #tpu.memory_space<vmem>>, %arg4: memref<32x2xf32, #tpu.memory_space<vmem>>, %arg5: memref<32x1xf32, #tpu.memory_space<vmem>>, %arg6: memref<1x32x512xf32, #tpu.memory_space<vmem>>) attributes {dimension_semantics = [#tpu.dimension_semantics<parallel>], iteration_bounds = array<i64: 2>, scalar_prefetch = 0 : i64, scratch_operands = 0 : i64, tpu.core_type = #tpu.core_type<tc>, window_params = [{transform_indices = @transform_0, window_bounds = array<i64: 1, 32, 512>}, {pipeline_mode = #tpu.pipeline_mode<synchronous>, transform_indices = @transform_1, window_bounds = array<i64: 2, 32>}, {pipeline_mode = #tpu.pipeline_mode<synchronous>, transform_indices = @transform_2, window_bounds = array<i64: 2, 1>}, {pipeline_mode = #tpu.pipeline_mode<synchronous>, transform_indices = @transform_3, window_bounds = array<i64: 32, 2>}, {pipeline_mode = #tpu.pipeline_mode<synchronous>, transform_indices = @transform_4, window_bounds = array<i64: 32, 1>}, {transform_indices = @transform_5, window_bounds = array<i64: 1, 32, 512>}]} {
    %c0 = arith.constant 0 : index
    %c0_0 = arith.constant 0 : index
    %c0_1 = arith.constant 0 : index
    %0 = vector.load %arg1[%c0, %c0_0, %c0_1] : memref<1x32x512xf32, #tpu.memory_space<vmem>>, vector<1x32x512xf32>
    %1 = vector.shape_cast %0 : vector<1x32x512xf32> to vector<32x512xf32>
    %cst = arith.constant dense<0.000000e+00> : vector<32xf32>
    %2 = vector.multi_reduction <add>, %1, %cst [1] : vector<32x512xf32> to vector<32xf32>
    %3 = vector.shape_cast %2 : vector<32xf32> to vector<32x1xf32>
    %cst_2 = arith.constant 0.001953125 : f32
    %4 = vector.broadcast %cst_2 : f32 to vector<32x1xf32>
    %5 = arith.mulf %3, %4 : vector<32x1xf32>
    %c0_3 = arith.constant 0 : index
    %c0_4 = arith.constant 0 : index
    %6 = vector.load %arg2[%c0_3, %c0_4] : memref<2x32xf32, #tpu.memory_space<vmem>>, vector<2x32xf32>
    %cst_5 = arith.constant dense<0.000000e+00> : vector<2x1xf32>
    %7 = tpu.matmul %6, %5, %cst_5 {dimension_numbers = #tpu.dot_dimension_numbers<[1], [0], [0], [1], [0, 0, 1, 1], [], []>} : vector<2x32xf32>, vector<32x1xf32>, vector<2x1xf32> -> vector<2x1xf32>
    %c0_6 = arith.constant 0 : index
    %c0_7 = arith.constant 0 : index
    %8 = vector.load %arg3[%c0_6, %c0_7] : memref<2x1xf32, #tpu.memory_space<vmem>>, vector<2x1xf32>
    %9 = arith.addf %7, %8 : vector<2x1xf32>
    %cst_8 = arith.constant 0.000000e+00 : f32
    %10 = vector.broadcast %cst_8 : f32 to vector<2x1xf32>
    %11 = arith.maximumf %9, %10 : vector<2x1xf32>
    %c0_9 = arith.constant 0 : index
    %c0_10 = arith.constant 0 : index
    %12 = vector.load %arg4[%c0_9, %c0_10] : memref<32x2xf32, #tpu.memory_space<vmem>>, vector<32x2xf32>
    %cst_11 = arith.constant dense<0.000000e+00> : vector<32x1xf32>
    %13 = tpu.matmul %12, %11, %cst_11 {dimension_numbers = #tpu.dot_dimension_numbers<[1], [0], [0], [1], [0, 0, 1, 1], [], []>} : vector<32x2xf32>, vector<2x1xf32>, vector<32x1xf32> -> vector<32x1xf32>
    %c0_12 = arith.constant 0 : index
    %c0_13 = arith.constant 0 : index
    %14 = vector.load %arg5[%c0_12, %c0_13] : memref<32x1xf32, #tpu.memory_space<vmem>>, vector<32x1xf32>
    %15 = arith.addf %13, %14 : vector<32x1xf32>
    %cst_14 = arith.constant 0.000000e+00 : f32
    %16 = vector.broadcast %cst_14 : f32 to vector<32x1xf32>
    %17 = arith.subf %16, %15 : vector<32x1xf32>
    %18 = math.exp %17 : vector<32x1xf32>
    %cst_15 = arith.constant 1.000000e+00 : f32
    %19 = vector.broadcast %cst_15 : f32 to vector<32x1xf32>
    %20 = arith.addf %19, %18 : vector<32x1xf32>
    %cst_16 = arith.constant 1.000000e+00 : f32
    %21 = vector.broadcast %cst_16 : f32 to vector<32x1xf32>
    %22 = arith.divf %21, %20 : vector<32x1xf32>
    %23 = vector.broadcast %22 : vector<32x1xf32> to vector<32x512xf32>
    %24 = arith.mulf %1, %23 : vector<32x512xf32>
    %c0_17 = arith.constant 0 : index
    %c0_18 = arith.constant 0 : index
    %c0_19 = arith.constant 0 : index
    %25 = vector.load %arg6[%c0_17, %c0_18, %c0_19] : memref<1x32x512xf32, #tpu.memory_space<vmem>>, vector<1x32x512xf32>
    %26 = vector.shape_cast %25 : vector<1x32x512xf32> to vector<32x512xf32>
    %27 = vector.shape_cast %24 : vector<32x512xf32> to vector<1x32x512xf32>
    tpu.vector_store %arg6[%c0_17, %c0_18, %c0_19], %27 {strides = array<i32>} : memref<1x32x512xf32, #tpu.memory_space<vmem>>, vector<1x32x512xf32>,
    return
  }
  func.func @transform_0(%arg0: i32) -> (i32, i32, i32) {
    %c0_i32 = arith.constant 0 : i32
    %c0_i32_0 = arith.constant 0 : i32
    %c0_i32_1 = arith.constant 0 : i32
    return %arg0, %c0_i32, %c0_i32_0 : i32, i32, i32
  }
  func.func @transform_1(%arg0: i32) -> (i32, i32) {
    %c0_i32 = arith.constant 0 : i32
    %c0_i32_0 = arith.constant 0 : i32
    %c0_i32_1 = arith.constant 0 : i32
    return %c0_i32, %c0_i32_0 : i32, i32
  }
  func.func @transform_2(%arg0: i32) -> (i32, i32) {
    %c0_i32 = arith.constant 0 : i32
    %c0_i32_0 = arith.constant 0 : i32
    %c0_i32_1 = arith.constant 0 : i32
    return %c0_i32, %c0_i32_0 : i32, i32
  }
  func.func @transform_3(%arg0: i32) -> (i32, i32) {
    %c0_i32 = arith.constant 0 : i32
    %c0_i32_0 = arith.constant 0 : i32
    %c0_i32_1 = arith.constant 0 : i32
    return %c0_i32, %c0_i32_0 : i32, i32
  }
  func.func @transform_4(%arg0: i32) -> (i32, i32) {
    %c0_i32 = arith.constant 0 : i32
    %c0_i32_0 = arith.constant 0 : i32
    %c0_i32_1 = arith.constant 0 : i32
    return %c0_i32, %c0_i32_0 : i32, i32
  }
  func.func @transform_5(%arg0: i32) -> (i32, i32, i32) {
    %c0_i32 = arith.constant 0 : i32
    %c0_i32_0 = arith.constant 0 : i32
    %c0_i32_1 = arith.constant 0 : i32
    return %arg0, %c0_i32, %c0_i32_0 : i32, i32, i32
  }
}

</mosaic_0001>

<llo_original>
// kernel: selayer_forward.1
$region0: #{selayer_forward.1}
  #allocation0 [shape = 'u32[]', space=smem, size = 0x4, offset = 0x4, fixed_abs, tag = 'smem constant byte address 0x4 - core index']
  #allocation1 [shape = 'u32[144,128]{1,0:T(1,128)}', space=vmem, size = 0x12000, scoped, tag = 'internal scratch']
  %s0 = inlined_call_operand.vmem [shape: f32[2,32,512], index: 0, kind: input, shape index: {}]
  %s1 = inlined_call_operand.vmem [shape: f32[2,32], index: 1, kind: input, shape index: {}]
  %s2 = inlined_call_operand.vmem [shape: f32[2,1], index: 2, kind: input, shape index: {}]
  %s3 = inlined_call_operand.vmem [shape: f32[32,2], index: 3, kind: input, shape index: {}]
  %s4 = inlined_call_operand.vmem [shape: f32[32,1], index: 4, kind: input, shape index: {}]
  %s5 = inlined_call_operand.vmem [shape: f32[2,32,512], index: 5, kind: output, shape index: {}]
  %s6 = sld [smem:[#allocation0]]
  $region53: #{selayer_forward.1} parent=0
    _
  %s8 = ssub.s32 1, %s6
  %s9 = scalar_select 0, %s8, %s6
  loop: start=0, step=1, limit=4
  $region2: #{selayer_forward.1} parent=0 // loop_pre_header
    _
  $region3: #{selayer_forward.1} parent=0 // loop_header
    %s11 = sphi 0, %s15
    %p12 = scmp.ge.s32.totalorder %s11, 4
    %s21 = sphi 0, %s23
    %s24 = sphi 0, %s21
    %s25 = sphi 0, %s24
    %s41 = sphi 0, %s25
    %s45 = sphi 0, %s45
    %s47 = sphi 0, %s45
    %s48 = sphi 0, %s47
    %s62 = sphi 0, %s48
    %s66 = sphi 0, %s66
    %s68 = sphi 0, %s66
    %s69 = sphi 0, %s68
    %s83 = sphi 0, %s69
    %s87 = sphi 0, %s87
    %s89 = sphi 0, %s87
    %s90 = sphi 0, %s89
    %s104 = sphi 0, %s90
    %s108 = sphi 0, %s108
    %s110 = sphi 0, %s108
    %s111 = sphi 0, %s110
    %s125 = sphi 0, %s111
    %s131 = sphi 0, %s133
    %s134 = sphi 0, %s131
    %s135 = sphi 0, %s134
    %s151 = sphi 0, %s135
  $region4: #{selayer_forward.1} parent=0 // loop_header_branch
    %14 = sbr.rel (%p12) target = $region8
  $region5: #{selayer_forward.1} parent=0 // loop_body
    %s16 = ssub.s32 %s11, 1
    %s17 = ssub.s32 %s11, 2
    %s18 = sadd.s32 %s11, 1
    %s19 = ssub.s32 %s11, %s18
    %p20 = scmp.eq.s32.totalorder %s19, 0
    %s22 = sadd.s32 %s21, 1
    %s23 = scalar_select %p20, %s21, %s22
    %p26 = pneg %p20
    %p27 = scmp.eq.s32.totalorder %s11, 1
    %p28 = por %p26, %p27
    %p29 = scmp.ne.s32.totalorder %s21, %s24
    %p30 = scmp.eq.s32.totalorder %s11, 0
    %p31 = por %p29, %p30
    %p32 = scmp.ne.s32.totalorder %s21, %s24
    %p33 = scmp.eq.s32.totalorder %s16, 1
    %p34 = por %p32, %p33
    %p35 = scmp.ne.s32.totalorder %s24, %s25
    %p36 = scmp.eq.s32.totalorder %s16, 0
    %p37 = por %p35, %p36
    %p38 = scmp.ne.s32.totalorder %s24, %s25
    %p39 = scmp.eq.s32.totalorder %s17, 1
    %p40 = por %p38, %p39
    %p42 = scmp.ne.s32.totalorder %s25, %s41
    %p43 = scmp.eq.s32.totalorder %s17, 0
    %p44 = por %p42, %p43
    %s46 = sadd.s32 %s45, 1
    %p49 = scmp.eq.s32.totalorder %s11, 1
    %p50 = scmp.ne.s32.totalorder %s45, %s47
    %p51 = scmp.eq.s32.totalorder %s11, 0
    %p52 = por %p50, %p51
    %p53 = scmp.ne.s32.totalorder %s45, %s47
    %p54 = scmp.eq.s32.totalorder %s16, 1
    %p55 = por %p53, %p54
    %p56 = scmp.ne.s32.totalorder %s47, %s48
    %p57 = scmp.eq.s32.totalorder %s16, 0
    %p58 = por %p56, %p57
    %p59 = scmp.ne.s32.totalorder %s47, %s48
    %p60 = scmp.eq.s32.totalorder %s17, 1
    %p61 = por %p59, %p60
    %p63 = scmp.ne.s32.totalorder %s48, %s62
    %p64 = scmp.eq.s32.totalorder %s17, 0
    %p65 = por %p63, %p64
    %s67 = sadd.s32 %s66, 1
    %p70 = scmp.eq.s32.totalorder %s11, 1
    %p71 = scmp.ne.s32.totalorder %s66, %s68
    %p72 = scmp.eq.s32.totalorder %s11, 0
    %p73 = por %p71, %p72
    %p74 = scmp.ne.s32.totalorder %s66, %s68
    %p75 = scmp.eq.s32.totalorder %s16, 1
    %p76 = por %p74, %p75
    %p77 = scmp.ne.s32.totalorder %s68, %s69
    %p78 = scmp.eq.s32.totalorder %s16, 0
    %p79 = por %p77, %p78
    %p80 = scmp.ne.s32.totalorder %s68, %s69
    %p81 = scmp.eq.s32.totalorder %s17, 1
    %p82 = por %p80, %p81
    %p84 = scmp.ne.s32.totalorder %s69, %s83
    %p85 = scmp.eq.s32.totalorder %s17, 0
    %p86 = por %p84, %p85
    %s88 = sadd.s32 %s87, 1
    %p91 = scmp.eq.s32.totalorder %s11, 1
    %p92 = scmp.ne.s32.totalorder %s87, %s89
    %p93 = scmp.eq.s32.totalorder %s11, 0
    %p94 = por %p92, %p93
    %p95 = scmp.ne.s32.totalorder %s87, %s89
    %p96 = scmp.eq.s32.totalorder %s16, 1
    %p97 = por %p95, %p96
    %p98 = scmp.ne.s32.totalorder %s89, %s90
    %p99 = scmp.eq.s32.totalorder %s16, 0
    %p100 = por %p98, %p99
    %p101 = scmp.ne.s32.totalorder %s89, %s90
    %p102 = scmp.eq.s32.totalorder %s17, 1
    %p103 = por %p101, %p102
    %p105 = scmp.ne.s32.totalorder %s90, %s104
    %p106 = scmp.eq.s32.totalorder %s17, 0
    %p107 = por %p105, %p106
    %s109 = sadd.s32 %s108, 1
    %p112 = scmp.eq.s32.totalorder %s11, 1
    %p113 = scmp.ne.s32.totalorder %s108, %s110
    %p114 = scmp.eq.s32.totalorder %s11, 0
    %p115 = por %p113, %p114
    %p116 = scmp.ne.s32.totalorder %s108, %s110
    %p117 = scmp.eq.s32.totalorder %s16, 1
    %p118 = por %p116, %p117
    %p119 = scmp.ne.s32.totalorder %s110, %s111
    %p120 = scmp.eq.s32.totalorder %s16, 0
    %p121 = por %p119, %p120
    %p122 = scmp.ne.s32.totalorder %s110, %s111
    %p123 = scmp.eq.s32.totalorder %s17, 1
    %p124 = por %p122, %p123
    %p126 = scmp.ne.s32.totalorder %s111, %s125
    %p127 = scmp.eq.s32.totalorder %s17, 0
    %p128 = por %p126, %p127
    %s129 = ssub.s32 %s11, %s18
    %p130 = scmp.eq.s32.totalorder %s129, 0
    %s132 = sadd.s32 %s131, 1
    %s133 = scalar_select %p130, %s131, %s132
    %p136 = pneg %p130
    %p137 = scmp.eq.s32.totalorder %s11, 1
    %p138 = por %p136, %p137
    %p139 = scmp.ne.s32.totalorder %s131, %s134
    %p140 = scmp.eq.s32.totalorder %s11, 0
    %p141 = por %p139, %p140
    %p142 = scmp.ne.s32.totalorder %s131, %s134
    %p143 = scmp.eq.s32.totalorder %s16, 1
    %p144 = por %p142, %p143
    %p145 = scmp.ne.s32.totalorder %s134, %s135
    %p146 = scmp.eq.s32.totalorder %s16, 0
    %p147 = por %p145, %p146
    %p148 = scmp.ne.s32.totalorder %s134, %s135
    %p149 = scmp.eq.s32.totalorder %s17, 1
    %p150 = por %p148, %p149
    %p152 = scmp.ne.s32.totalorder %s135, %s151
    %p153 = scmp.eq.s32.totalorder %s17, 0
    %p154 = por %p152, %p153
    %p155 = scmp.le.s32.totalorder 1, %s11
    %p156 = scmp.lt.s32.totalorder %s11, 3
    %p157 = pnand %p155, %p156
    %p158 = pneg %p157
    // Predicated region
    $region9: #{selayer_forward.1} parent=5 // pred_check
      _
    $region10: #{selayer_forward.1} parent=5 // pred_check_branch
      %160 = sbr.rel (%p157) target = $region12
    $region11: #{selayer_forward.1} parent=5 // pred_region
      %s161 = ssub.s32 %s11, 1
      // Predicated region
      $region13: #{selayer_forward.1} parent=11 // pred_check
        %p162 = pneg %p58
      $region14: #{selayer_forward.1} parent=11 // pred_check_branch
        %164 = sbr.rel (%p162) target = $region16
      $region15: #{selayer_forward.1} parent=11 // pred_region
        _
      $region16: #{selayer_forward.1} parent=11 // pred_fallthru
        _
      // Predicated region
      $region17: #{selayer_forward.1} parent=11 // pred_check
        %p165 = pneg %p79
      $region18: #{selayer_forward.1} parent=11 // pred_check_branch
        %167 = sbr.rel (%p165) target = $region20
      $region19: #{selayer_forward.1} parent=11 // pred_region
        _
      $region20: #{selayer_forward.1} parent=11 // pred_fallthru
        _
      // Predicated region
      $region21: #{selayer_forward.1} parent=11 // pred_check
        %p168 = pneg %p100
      $region22: #{selayer_forward.1} parent=11 // pred_check_branch
        %170 = sbr.rel (%p168) target = $region24
      $region23: #{selayer_forward.1} parent=11 // pred_region
        _
      $region24: #{selayer_forward.1} parent=11 // pred_fallthru
        _
      // Predicated region
      $region25: #{selayer_forward.1} parent=11 // pred_check
        %p171 = pneg %p121
      $region26: #{selayer_forward.1} parent=11 // pred_check_branch
        %173 = sbr.rel (%p171) target = $region28
      $region27: #{selayer_forward.1} parent=11 // pred_region
        _
      $region28: #{selayer_forward.1} parent=11 // pred_fallthru
        _
    $region12: #{selayer_forward.1} parent=5 // pred_fallthru
      _
    %p174 = scmp.lt.s32.totalorder %s11, 2
    // Predicated region
    $region29: #{selayer_forward.1} parent=5 // pred_check
      %p175 = pneg %p174
    $region30: #{selayer_forward.1} parent=5 // pred_check_branch
      %177 = sbr.rel (%p175) target = $region32
    $region31: #{selayer_forward.1} parent=5 // pred_region
      // Predicated region
      $region33: #{selayer_forward.1} parent=31 // pred_check
        %p178 = pneg %p31
      $region34: #{selayer_forward.1} parent=31 // pred_check_branch
        %180 = sbr.rel (%p178) target = $region36
      $region35: #{selayer_forward.1} parent=31 // pred_region
        %p181 = scmp.lt.s32.totalorder %s11, 1
        %s182 = scalar_select %p181, %s11, 1
        %s183 = smul.addr %s182, 16
        %s184 = smul.addr %s183, 8
        %s185 = scalar_lea.vmem %s0, %s184
      $region36: #{selayer_forward.1} parent=31 // pred_fallthru
        _
    $region32: #{selayer_forward.1} parent=5 // pred_fallthru
      _
    %p186 = scmp.le.s32.totalorder 1, %s11
    %p187 = scmp.lt.s32.totalorder %s11, 3
    %p188 = pnand %p186, %p187
    %p189 = pneg %p188
    // Predicated region
    $region37: #{selayer_forward.1} parent=5 // pred_check
      _
    $region38: #{selayer_forward.1} parent=5 // pred_check_branch
      %191 = sbr.rel (%p188) target = $region40
    $region39: #{selayer_forward.1} parent=5 // pred_region
      %s192 = ssub.s32 %s11, 1
      %p193 = scmp.lt.s32.totalorder %s16, 1
      %s194 = scalar_select %p193, %s16, 1
      %s195 = smul.addr %s194, 16
      %s196 = smul.addr %s195, 8
      %s197 = scalar_lea.vmem %s0, %s196
      %p198 = pneg %p37
      %p199 = pneg %p34
      %p200 = pneg %p58
      %p201 = pneg %p55
      %p202 = pneg %p79
      %p203 = pneg %p76
      %p204 = pneg %p100
      %p205 = pneg %p97
      %p206 = pneg %p121
      %p207 = pneg %p118
      %p208 = pneg %p147
      %p209 = pneg %p144
      %p210 = scmp.lt.s32.totalorder %s16, 1
      %s211 = scalar_select %p210, %s16, 1
      %s212 = smul.addr %s211, 16
      %s213 = smul.addr %s212, 8
      %s214 = scalar_lea.vmem %s5, %s213
      %p215 = scmp.lt.s32.totalorder %s16, 1
      %s216 = scalar_select %p215, %s16, 1
      %s217 = smul.addr %s216, 16
      %s218 = smul.addr %s217, 8
      %s219 = scalar_lea.vmem %s0, %s218
      %p220 = scmp.lt.s32.totalorder %s16, 1
      %s221 = scalar_select %p220, %s16, 1
      %s222 = smul.addr %s221, 16
      %s223 = smul.addr %s222, 8
      %s224 = scalar_lea.vmem %s5, %s223
      %v225 = vld [vmem:[%s219] sm:$0xff]
      %v226 = vld [vmem:[%s219 + $0x8] sm:$0xff]
      %v227 = vld [vmem:[%s219 + $0x10] sm:$0xff]
      %v228 = vld [vmem:[%s219 + $0x18] sm:$0xff]
      %v229 = vld [vmem:[%s219 + $0x20] sm:$0xff]
      %v230 = vld [vmem:[%s219 + $0x28] sm:$0xff]
      %v231 = vld [vmem:[%s219 + $0x30] sm:$0xff]
      %v232 = vld [vmem:[%s219 + $0x38] sm:$0xff]
      %v233 = vld [vmem:[%s219 + $0x40] sm:$0xff]
      %v234 = vld [vmem:[%s219 + $0x48] sm:$0xff]
      %v235 = vld [vmem:[%s219 + $0x50] sm:$0xff]
      %v236 = vld [vmem:[%s219 + $0x58] sm:$0xff]
      %v237 = vld [vmem:[%s219 + $0x60] sm:$0xff]
      %v238 = vld [vmem:[%s219 + $0x68] sm:$0xff]
      %v239 = vld [vmem:[%s219 + $0x70] sm:$0xff]
      %v240 = vld [vmem:[%s219 + $0x78] sm:$0xff]
      %v241 = vadd.f32 %v225, %v226
      %v242 = vadd.f32 %v241, %v227
      %v243 = vadd.f32 %v242, %v228
      %244 = vadd.xlane.f32.xlu0 %v243
      %v245 = vpop.xlane.xlu0 %244
      %v246 = vadd.f32 %v229, %v230
      %v247 = vadd.f32 %v246, %v231
      %v248 = vadd.f32 %v247, %v232
      %249 = vadd.xlane.f32.xlu0 %v248
      %v250 = vpop.xlane.xlu0 %249
      %v251 = vadd.f32 %v233, %v234
      %v252 = vadd.f32 %v251, %v235
      %v253 = vadd.f32 %v252, %v236
      %254 = vadd.xlane.f32.xlu0 %v253
      %v255 = vpop.xlane.xlu0 %254
      %v256 = vadd.f32 %v237, %v238
      %v257 = vadd.f32 %v256, %v239
      %v258 = vadd.f32 %v257, %v240
      %259 = vadd.xlane.f32.xlu0 %v258
      %v260 = vpop.xlane.xlu0 %259
      %v261 = vmul.f32 %v245, 0.001953125
      %v262 = vmul.f32 %v250, 0.001953125
      %v263 = vmul.f32 %v255, 0.001953125
      %v264 = vmul.f32 %v260, 0.001953125
      %v265 = vld [vmem:[%s1] sm:$0x3]
      %v266 = vld [vmem:[%s2] sm:$0x3]
      %vm267 = vcmask 261120
      %v269 = vsel %vm267, %v265, 0
      %271 = vmatprep.subr.mxu0 0.0
      %272 = vmatpush1.msra.mxu0 0.0
      %273 = vmatprep.subr.mxu0 0.0
      %274 = vmatpush1.msra.mxu0 0.0
      %275 = vmatprep.subr.mxu0 0.0
      %276 = vmatpush1.msra.mxu0 0.0
      %277 = vmatprep.subr.mxu0 0.0
      %278 = vmatpush1.msra.mxu0 0.0
      %279 = vmatprep.subr.mxu0 0.0
      %280 = vmatpush1.msra.mxu0 0.0
      %281 = vmatprep.subr.mxu0 0.0
      %282 = vmatpush1.msra.mxu0 0.0
      %283 = vmatprep.subr.mxu0 0.0
      %284 = vmatpush1.msra.mxu0 0.0
      %285 = vmatprep.subr.mxu0 0.0
      %286 = vmatpush1.msra.mxu0 0.0
      %287 = vmatprep.subr.mxu0 0.0
      %288 = vmatpush1.msra.mxu0 0.0
      %289 = vmatprep.subr.mxu0 0.0
      %290 = vmatpush1.msra.mxu0 0.0
      %291 = vmatprep.subr.mxu0 0.0
      %292 = vmatpush1.msra.mxu0 0.0
      %293 = vmatprep.subr.mxu0 0.0
      %294 = vmatpush1.msra.mxu0 0.0
      %295 = vmatprep.subr.mxu0 0.0
      %296 = vmatpush1.msra.mxu0 %v264
      %297 = vmatprep.subr.mxu0 0.0
      %298 = vmatpush1.msra.mxu0 %v263
      %299 = vmatprep.subr.mxu0 0.0
      %300 = vmatpush1.msra.mxu0 %v262
      %301 = vmatprep.subr.mxu0 0.0
      %302 = vmatpush1.msra.mxu0 %v261
      %303 = vmatprep.subr.mxu0 0.0
      %304 = vmatpush2.msra.mxu0 0.0
      %305 = vmatprep.subr.mxu0 0.0
      %306 = vmatpush2.msra.mxu0 0.0
      %307 = vmatprep.subr.mxu0 0.0
      %308 = vmatpush2.msra.mxu0 0.0
      %309 = vmatprep.subr.mxu0 0.0
      %310 = vmatpush2.msra.mxu0 0.0
      %311 = vmatprep.subr.mxu0 0.0
      %312 = vmatpush2.msra.mxu0 0.0
      %313 = vmatprep.subr.mxu0 0.0
      %314 = vmatpush2.msra.mxu0 0.0
      %315 = vmatprep.subr.mxu0 0.0
      %316 = vmatpush2.msra.mxu0 0.0
      %317 = vmatprep.subr.mxu0 0.0
      %318 = vmatpush2.msra.mxu0 0.0
      %319 = vmatprep.subr.mxu0 0.0
      %320 = vmatpush2.msra.mxu0 0.0
      %321 = vmatprep.subr.mxu0 0.0
      %322 = vmatpush2.msra.mxu0 0.0
      %323 = vmatprep.subr.mxu0 0.0
      %324 = vmatpush2.msra.mxu0 0.0
      %325 = vmatprep.subr.mxu0 0.0
      %326 = vmatpush2.msra.mxu0 0.0
      %327 = vmatprep.subr.mxu0 0.0
      %328 = vmatpush2.msra.mxu0 0.0
      %329 = vmatprep.subr.mxu0 0.0
      %330 = vmatpush2.msra.mxu0 0.0
      %331 = vmatprep.subr.mxu0 0.0
      %332 = vmatpush2.msra.mxu0 0.0
      %333 = vmatprep.subr.mxu0 0.0
      %334 = vmatpush2.msra.mxu0 0.0
      %335 = vmatprep.mubr.f32.mxu0 0.0
      %336 = vmatmul.mubr.f32.gmra.mxu0 %v269
      %v337 = vpop.f32.mrf.mxu0
      %v338 = vadd.f32 %v266, %v337
      %v339 = vpop.f32.mrf.mxu0
      %340 = vdwg.mxu0
      %v341 = vmax.f32 %v338, 0.0
      %v342 = vld [vmem:[%s3] sm:$0xff]
      %v343 = vld [vmem:[%s3 + $0x8] sm:$0xff]
      %v344 = vld [vmem:[%s3 + $0x10] sm:$0xff]
      %v345 = vld [vmem:[%s3 + $0x18] sm:$0xff]
      %v346 = vld [vmem:[%s4] sm:$0xff]
      %v347 = vld [vmem:[%s4 + $0x8] sm:$0xff]
      %v348 = vld [vmem:[%s4 + $0x10] sm:$0xff]
      %v349 = vld [vmem:[%s4 + $0x18] sm:$0xff]
      %vm350 = vcmask 15360
      %v352 = vsel %vm350, %v342, 0
      %v355 = vsel %vm350, %v343, 0
      %v358 = vsel %vm350, %v344, 0
      %v361 = vsel %vm350, %v345, 0
      %vm363 = vcmask 1041408
      %v365 = vsel %vm363, %v341, 0
      %367 = vmatprep.subr.mxu0 0.0
      %368 = vmatpush1.msra.mxu0 0.0
      %369 = vmatprep.subr.mxu0 0.0
      %370 = vmatpush1.msra.mxu0 0.0
      %371 = vmatprep.subr.mxu0 0.0
      %372 = vmatpush1.msra.mxu0 0.0
      %373 = vmatprep.subr.mxu0 0.0
      %374 = vmatpush1.msra.mxu0 0.0
      %375 = vmatprep.subr.mxu0 0.0
      %376 = vmatpush1.msra.mxu0 0.0
      %377 = vmatprep.subr.mxu0 0.0
      %378 = vmatpush1.msra.mxu0 0.0
      %379 = vmatprep.subr.mxu0 0.0
      %380 = vmatpush1.msra.mxu0 0.0
      %381 = vmatprep.subr.mxu0 0.0
      %382 = vmatpush1.msra.mxu0 0.0
      %383 = vmatprep.subr.mxu0 0.0
      %384 = vmatpush1.msra.mxu0 0.0
      %385 = vmatprep.subr.mxu0 0.0
      %386 = vmatpush1.msra.mxu0 0.0
      %387 = vmatprep.subr.mxu0 0.0
      %388 = vmatpush1.msra.mxu0 0.0
      %389 = vmatprep.subr.mxu0 0.0
      %390 = vmatpush1.msra.mxu0 0.0
      %391 = vmatprep.subr.mxu0 0.0
      %392 = vmatpush1.msra.mxu0 0.0
      %393 = vmatprep.subr.mxu0 0.0
      %394 = vmatpush1.msra.mxu0 0.0
      %395 = vmatprep.subr.mxu0 0.0
      %396 = vmatpush1.msra.mxu0 0.0
      %397 = vmatprep.subr.mxu0 0.0
      %398 = vmatpush1.msra.mxu0 %v365
      %399 = vmatprep.subr.mxu0 0.0
      %400 = vmatpush2.msra.mxu0 0.0
      %401 = vmatprep.subr.mxu0 0.0
      %402 = vmatpush2.msra.mxu0 0.0
      %403 = vmatprep.subr.mxu0 0.0
      %404 = vmatpush2.msra.mxu0 0.0
      %405 = vmatprep.subr.mxu0 0.0
      %406 = vmatpush2.msra.mxu0 0.0
      %407 = vmatprep.subr.mxu0 0.0
      %408 = vmatpush2.msra.mxu0 0.0
      %409 = vmatprep.subr.mxu0 0.0
      %410 = vmatpush2.msra.mxu0 0.0
      %411 = vmatprep.subr.mxu0 0.0
      %412 = vmatpush2.msra.mxu0 0.0
      %413 = vmatprep.subr.mxu0 0.0
      %414 = vmatpush2.msra.mxu0 0.0
      %415 = vmatprep.subr.mxu0 0.0
      %416 = vmatpush2.msra.mxu0 0.0
      %417 = vmatprep.subr.mxu0 0.0
      %418 = vmatpush2.msra.mxu0 0.0
      %419 = vmatprep.subr.mxu0 0.0
      %420 = vmatpush2.msra.mxu0 0.0
      %421 = vmatprep.subr.mxu0 0.0
      %422 = vmatpush2.msra.mxu0 0.0
      %423 = vmatprep.subr.mxu0 0.0
      %424 = vmatpush2.msra.mxu0 0.0
      %425 = vmatprep.subr.mxu0 0.0
      %426 = vmatpush2.msra.mxu0 0.0
      %427 = vmatprep.subr.mxu0 0.0
      %428 = vmatpush2.msra.mxu0 0.0
      %429 = vmatprep.subr.mxu0 0.0
      %430 = vmatpush2.msra.mxu0 0.0
      %431 = vmatprep.mubr.f32.mxu0 0.0
      %432 = vmatmul.mubr.f32.gmra.mxu0 %v352
      %v433 = vpop.f32.mrf.mxu0
      %v434 = vadd.f32 %v346, %v433
      %v435 = vpop.f32.mrf.mxu0
      %436 = vmatprep.mubr.f32.mxu0 0.0
      %437 = vmatmul.mubr.f32.gmra.mxu0 %v355
      %v438 = vpop.f32.mrf.mxu0
      %v439 = vadd.f32 %v347, %v438
      %v440 = vpop.f32.mrf.mxu0
      %441 = vmatprep.mubr.f32.mxu0 0.0
      %442 = vmatmul.mubr.f32.gmra.mxu0 %v358
      %v443 = vpop.f32.mrf.mxu0
      %v444 = vadd.f32 %v348, %v443
      %v445 = vpop.f32.mrf.mxu0
      %446 = vmatprep.mubr.f32.mxu0 0.0
      %447 = vmatmul.mubr.f32.gmra.mxu0 %v361
      %v448 = vpop.f32.mrf.mxu0
      %v449 = vadd.f32 %v349, %v448
      %v450 = vpop.f32.mrf.mxu0
      %451 = vdwg.mxu0
      %v452 = vsub.f32 0.0, %v434
      %v453 = vsub.f32 0.0, %v439
      %v454 = vsub.f32 0.0, %v444
      %v455 = vsub.f32 0.0, %v449
      %v456 = vmul.f32 %v452, 1.442695
      %v457 = vpow.pop %v456
      %v458 = vmul.f32 %v453, 1.442695
      %v459 = vpow.pop %v458
      %v460 = vmul.f32 %v454, 1.442695
      %v461 = vpow.pop %v460
      %v462 = vmul.f32 %v455, 1.442695
      %v463 = vpow.pop %v462
      %v464 = vadd.f32 %v457, 1.0
      %v465 = vadd.f32 %v459, 1.0
      %v466 = vadd.f32 %v461, 1.0
      %v467 = vadd.f32 %v463, 1.0
      %v468 = vrcp.pop %v464
      %v469 = vmul.f32 1.0, %v468
      %v470 = vrcp.pop %v465
      %v471 = vmul.f32 1.0, %v470
      %v472 = vrcp.pop %v466
      %v473 = vmul.f32 1.0, %v472
      %v474 = vrcp.pop %v467
      %v475 = vmul.f32 1.0, %v474
      %477 = vset.pattern.permute.xlu0 0
      %478 = vperm.xlu0 %477, %v469
      %v479 = vpop.permute.xlu0 %478
      %482 = vset.pattern.permute.xlu0 0
      %483 = vperm.xlu0 %482, %v471
      %v484 = vpop.permute.xlu0 %483
      %487 = vset.pattern.permute.xlu0 0
      %488 = vperm.xlu0 %487, %v473
      %v489 = vpop.permute.xlu0 %488
      %492 = vset.pattern.permute.xlu0 0
      %493 = vperm.xlu0 %492, %v475
      %v494 = vpop.permute.xlu0 %493
      %v496 = vmul.f32 %v225, %v479
      %v497 = vmul.f32 %v226, %v479
      %v498 = vmul.f32 %v227, %v479
      %v499 = vmul.f32 %v228, %v479
      %v500 = vmul.f32 %v229, %v484
      %v501 = vmul.f32 %v230, %v484
      %v502 = vmul.f32 %v231, %v484
      %v503 = vmul.f32 %v232, %v484
      %v504 = vmul.f32 %v233, %v489
      %v505 = vmul.f32 %v234, %v489
      %v506 = vmul.f32 %v235, %v489
      %v507 = vmul.f32 %v236, %v489
      %v508 = vmul.f32 %v237, %v494
      %v509 = vmul.f32 %v238, %v494
      %v510 = vmul.f32 %v239, %v494
      %v511 = vmul.f32 %v240, %v494
      %512 = vst [vmem:[%s224] sm:$0xff] %v496
      %513 = vst [vmem:[%s224 + $0x8] sm:$0xff] %v497
      %514 = vst [vmem:[%s224 + $0x10] sm:$0xff] %v498
      %515 = vst [vmem:[%s224 + $0x18] sm:$0xff] %v499
      %516 = vst [vmem:[%s224 + $0x20] sm:$0xff] %v500
      %517 = vst [vmem:[%s224 + $0x28] sm:$0xff] %v501
      %518 = vst [vmem:[%s224 + $0x30] sm:$0xff] %v502
      %519 = vst [vmem:[%s224 + $0x38] sm:$0xff] %v503
      %520 = vst [vmem:[%s224 + $0x40] sm:$0xff] %v504
      %521 = vst [vmem:[%s224 + $0x48] sm:$0xff] %v505
      %522 = vst [vmem:[%s224 + $0x50] sm:$0xff] %v506
      %523 = vst [vmem:[%s224 + $0x58] sm:$0xff] %v507
      %524 = vst [vmem:[%s224 + $0x60] sm:$0xff] %v508
      %525 = vst [vmem:[%s224 + $0x68] sm:$0xff] %v509
      %526 = vst [vmem:[%s224 + $0x70] sm:$0xff] %v510
      %527 = vst [vmem:[%s224 + $0x78] sm:$0xff] %v511
      %p528 = scmp.lt.s32.totalorder %s16, 1
      %s529 = scalar_select %p528, %s16, 1
      %s530 = smul.addr %s529, 16
      %s531 = smul.addr %s530, 8
      %s532 = scalar_lea.vmem %s5, %s531
      // Predicated region
      $region41: #{selayer_forward.1} parent=39 // pred_check
        %p533 = pneg %p144
      $region42: #{selayer_forward.1} parent=39 // pred_check_branch
        %535 = sbr.rel (%p533) target = $region44
      $region43: #{selayer_forward.1} parent=39 // pred_region
        _
      $region44: #{selayer_forward.1} parent=39 // pred_fallthru
        _
    $region40: #{selayer_forward.1} parent=5 // pred_fallthru
      _
    %p536 = scmp.le.s32.totalorder 2, %s11
    // Predicated region
    $region45: #{selayer_forward.1} parent=5 // pred_check
      %p537 = pneg %p536
    $region46: #{selayer_forward.1} parent=5 // pred_check_branch
      %539 = sbr.rel (%p537) target = $region48
    $region47: #{selayer_forward.1} parent=5 // pred_region
      %s540 = ssub.s32 %s11, 2
      // Predicated region
      $region49: #{selayer_forward.1} parent=47 // pred_check
        %p541 = pneg %p150
      $region50: #{selayer_forward.1} parent=47 // pred_check_branch
        %543 = sbr.rel (%p541) target = $region52
      $region51: #{selayer_forward.1} parent=47 // pred_region
        %p544 = scmp.lt.s32.totalorder %s17, 1
        %s545 = scalar_select %p544, %s17, 1
        %s546 = smul.addr %s545, 16
        %s547 = smul.addr %s546, 8
        %s548 = scalar_lea.vmem %s5, %s547
      $region52: #{selayer_forward.1} parent=47 // pred_fallthru
        _
    $region48: #{selayer_forward.1} parent=5 // pred_fallthru
      _
  $region6: #{selayer_forward.1} parent=0 // loop_footer
    %s15 = sadd.s32 1, %s11
  $region7: #{selayer_forward.1} parent=0 // loop_footer_branch
    %10 = sbr.rel target = $region3
  $region8: #{selayer_forward.1} parent=0 // loop_exit
    _

</llo_original>
